<compile_context>
chip_gen: v6e
topology: v6e:2x2x1
jax: 0.10.0
libtpu: 0.0.40
codegen_flags: <defaults>
</compile_context>

<pallas_src>
import jax
import jax.numpy as jnp
import numpy as np
from jax import lax
from jax.experimental import pallas as pl
from jax.experimental.pallas import tpu as pltpu


def _bilinear_matrix(out_size, in_size):
    """Row-interp matrix for F.interpolate(mode='bilinear', align_corners=True). NumPy."""
    L = np.zeros((out_size, in_size), np.float32)
    scale = 0.0 if out_size == 1 else (in_size - 1) / (out_size - 1)
    for i in range(out_size):
        s = i * scale
        i0 = min(int(np.floor(s)), in_size - 1)
        i1 = min(i0 + 1, in_size - 1)
        f = s - i0
        L[i, i0] += 1.0 - f
        L[i, i1] += f
    return L


def _interp_matrix(H, W, Ho, Wo, Wq):
    """Combined bilinear-upsample matrix acting on the [Ho, Wq]-flat cam layout.

    M[i*Wq + j, h*W + w] = Lh[h, i] * Lw[w, j]  for j < Wo; rows at j == Wq-1 (padding
    columns of the flat conv layout) stay zero so garbage columns never reach the output.
    """
    Lh = _bilinear_matrix(H, Ho)          # [H, Ho]
    Lw = _bilinear_matrix(W, Wo)          # [W, Wo]
    M = np.zeros((Ho * Wq, H * W), np.float32)
    for i in range(Ho):
        for j in range(Wo):
            M[i * Wq + j, :] = np.outer(Lh[:, i], Lw[:, j]).reshape(-1)
    return M


def _make_fused_kernel(Cin, Cf, Ho, Wo, Wq):
    """Fused conv3x3(s2,p1)+ReLU -> CAM reduction -> ReLU -> bilinear upsample -> min/max.

    One grid step == one batch element; feat/cam live only in VMEM/vregs (never hit HBM).
    """
    row_len = Ho * Wq  # flat conv domain: columns j==Wq-1 are padding garbage, zeroed by M.

    def kernel(x4_ref, kw_ref, bias_ref, wsel_ref, m_ref, up_ref, stats_ref, taps_ref):
        # -- 1) assemble the [9*Cin, Ho*Wq] tap matrix once (unit-stride flat slices).
        #    tap (ki,kj), channel ci: parity plane p=(ki%2)*2+(kj%2), flat offset
        #    (ki//2)*Wq + (kj//2) within that plane's row-major flattening.
        for ki in range(3):
            for kj in range(3):
                p = (ki % 2) * 2 + (kj % 2)
                off = (ki // 2) * Wq + (kj // 2)
                t = ki * 3 + kj
                for ci in range(Cin):
                    r = t * Cin + ci
                    c0 = p * Cin + ci
                    taps_ref[r:r + 1, :] = x4_ref[0, c0:c0 + 1, off:off + row_len]

        # -- 2) conv as one MXU matmul over (tap, cin); bias as a single [Cf,1] column add.
        feat = jnp.dot(kw_ref[...], taps_ref[...], preferred_element_type=jnp.float32)
        feat = jnp.maximum(feat + bias_ref[...], 0.0)             # [Cf, Ho*Wq]

        # -- 3) CAM channel reduction as a 1xCf matvec on the MXU; ReLU.
        cam = jnp.dot(wsel_ref[0], feat, preferred_element_type=jnp.float32)  # [1, Ho*Wq]
        cam = jnp.maximum(cam, 0.0)

        # -- 4) bilinear upsample (align_corners=True) as one flat matmul -> lane-dense
        #       [1, H*W] output (unmasked vector stores).
        up = jnp.dot(cam, m_ref[...], preferred_element_type=jnp.float32)
        up_ref[0] = up

        # -- 5) per-batch min/max merged into a single (1, 2) side output; the global
        #       (batch-wide) normalization is a fused XLA elementwise pass in the wrapper.
        mn = jnp.min(up, axis=1, keepdims=True)
        mx = jnp.max(up, axis=1, keepdims=True)
        stats_ref[0] = jnp.concatenate([mn, mx], axis=1)

    return kernel


@jax.jit
def gradcam_forward(x, ind, params):
    conv_w = params['conv_w'].astype(jnp.float32)
    conv_b = params['conv_b'].astype(jnp.float32)
    fc_w = params['fc_w'].astype(jnp.float32)
    # params['fc_b'] does not influence the CAM (gradient wrt feat is bias-free).

    B, Cin, H, W = x.shape
    Cf = conv_w.shape[0]
    Ho = (H + 2 - 3) // 2 + 1
    Wo = (W + 2 - 3) // 2 + 1
    Hq, Wq = Ho + 1, Wo + 1
    HW = H * W
    # flat plane length: room for the largest tap offset (Wq+1) plus Ho*Wq, lane-padded.
    Lflat = ((Hq * Wq + Wq + 1 + 127) // 128) * 128

    # ---- cheap wrapper-side prep: stride-parity planes, row-major flattened + zero-padded.
    xp = jnp.pad(x.astype(jnp.float32), ((0, 0), (0, 0), (1, 1), (1, 1)))
    planes = []
    for pi in range(2):
        for pj in range(2):
            pp = xp[:, :, pi::2, pj::2]
            pp = jnp.pad(pp, ((0, 0), (0, 0),
                              (0, Hq - pp.shape[2]), (0, Wq - pp.shape[3])))
            planes.append(pp.reshape(B, Cin, Hq * Wq))
    x4flat = jnp.concatenate(planes, axis=1)                     # [B, 4*Cin, Hq*Wq]
    x4flat = jnp.pad(x4flat, ((0, 0), (0, 0), (0, Lflat - Hq * Wq)))

    # conv weights as the MXU LHS [Cf, 9*Cin]; bias as a [Cf, 1] VMEM column.
    kw2d = conv_w.transpose(0, 2, 3, 1).reshape(Cf, 9 * Cin)
    bias_col = conv_b.reshape(Cf, 1)
    # analytic grad of gathered-logit-sum wrt feat == fc_w[ind].sum(1) / (Hf*Wf), constant
    # over HxW; the gather stays in the wrapper, the kernel sees a [B, 1, Cf] weight row.
    wsel = (fc_w[ind.astype(jnp.int32)].sum(axis=1) / float(Ho * Wo)).reshape(B, 1, Cf)

    M = jnp.asarray(_interp_matrix(H, W, Ho, Wo, Wq))            # [Ho*Wq, H*W], static

    cam_up, stats = pl.pallas_call(
        _make_fused_kernel(Cin, Cf, Ho, Wo, Wq),
        grid=(B,),
        in_specs=[
            pl.BlockSpec((1, 4 * Cin, Lflat), lambda b: (b, 0, 0)),   # flat parity planes
            pl.BlockSpec((Cf, 9 * Cin), lambda b: (0, 0)),            # kw2d (VMEM, MXU LHS)
            pl.BlockSpec((Cf, 1), lambda b: (0, 0)),                  # bias column
            pl.BlockSpec((1, 1, Cf), lambda b: (b, 0, 0)),            # per-batch CAM weights
            pl.BlockSpec((Ho * Wq, HW), lambda b: (0, 0)),            # flat interp matrix
        ],
        out_specs=(
            pl.BlockSpec((1, 1, HW), lambda b: (b, 0, 0)),            # lane-dense cam_up
            pl.BlockSpec((1, 1, 2), lambda b: (b, 0, 0)),             # merged [min, max]
        ),
        out_shape=(
            jax.ShapeDtypeStruct((B, 1, HW), jnp.float32),
            jax.ShapeDtypeStruct((B, 1, 2), jnp.float32),
        ),
        scratch_shapes=[pltpu.VMEM((9 * Cin, Ho * Wq), jnp.float32)],
        compiler_params=pltpu.CompilerParams(dimension_semantics=("parallel",)),
    )(x4flat, kw2d, bias_col, wsel, M)

    # Global (batch-wide, matching the reference) normalization: stats come from the kernel,
    # the elementwise pass is fused by XLA (single HBM read+write of cam_up).
    mn = jnp.min(stats[:, 0, 0])
    mx = jnp.max(stats[:, 0, 1])
    d = mx - mn
    d = jnp.where(d == 0.0, jnp.float32(1.0), d)   # guard: reference would NaN here
    cam = (cam_up - mn) / d
    return cam.reshape(B, 1, H, W)


# ---------------- Pure-JAX reference (for validation) --------------------------------
def gradcam_reference(x, ind, params):
    feat = lax.conv_general_dilated(
        x, params['conv_w'], window_strides=(2, 2), padding=((1, 1), (1, 1)),
        dimension_numbers=('NCHW', 'OIHW', 'NCHW'))
    feat = jax.nn.relu(feat + params['conv_b'][None, :, None, None])
    B, Cf, Hf, Wf = feat.shape
    w_sel = params['fc_w'][ind].sum(axis=1)                  # gather + sum over K
    weights = w_sel / (Hf * Wf)
    cam = jnp.einsum('bc,bchw->bhw', weights, feat)
    cam = jax.nn.relu(cam)
    H, W = x.shape[2], x.shape[3]
    Lh = jnp.asarray(_bilinear_matrix(H, Hf))
    Lw = jnp.asarray(_bilinear_matrix(W, Wf))
    cam = jnp.einsum('hf,bfg,wg->bhw', Lh, cam, Lw)
    cam = cam - cam.min()
    cam = cam / cam.max()
    return cam[:, None]


if __name__ == "__main__":
    key = jax.random.PRNGKey(0)
    kx, kw, kb, kf, kfb = jax.random.split(key, 5)
    B, Cin, H, W = 2, 4, 16, 16
    Cf, num_classes = 8, 10

    x = jax.random.normal(kx, (B, Cin, H, W), jnp.float32)
    ind = jnp.array([[3], [7]], jnp.int32)                   # torch.gather indices, [B, 1]
    params = {
        'conv_w': 0.1 * jax.random.normal(kw, (Cf, Cin, 3, 3), jnp.float32),
        'conv_b': 0.1 * jax.random.normal(kb, (Cf,), jnp.float32),
        'fc_w':  0.1 * jax.random.normal(kf, (num_classes, Cf), jnp.float32),
        'fc_b':  0.1 * jax.random.normal(kfb, (num_classes,), jnp.float32),  # unused by cam
    }

    out = jax.block_until_ready(gradcam_forward(x, ind, params))
    ref = jax.block_until_ready(gradcam_reference(x, ind, params))
    np.testing.assert_allclose(np.asarray(out), np.asarray(ref), rtol=1e-5, atol=1e-5)
    print("KERNEL_OK")
</pallas_src>

<mosaic_0001>
module attributes {stable_mosaic.version = 11 : i64} {
  func.func @kernel(%arg0: i32, %arg1: memref<1x16x128xf32, #tpu.memory_space<vmem>>, %arg2: memref<8x36xf32, #tpu.memory_space<vmem>>, %arg3: memref<8x1xf32, #tpu.memory_space<vmem>>, %arg4: memref<1x1x8xf32, #tpu.memory_space<vmem>>, %arg5: memref<72x256xf32, #tpu.memory_space<vmem>>, %arg6: memref<1x1x256xf32, #tpu.memory_space<vmem>>, %arg7: memref<1x1x2xf32, #tpu.memory_space<vmem>>, %arg8: memref<36x72xf32, #tpu.memory_space<vmem>>) attributes {dimension_semantics = [#tpu.dimension_semantics<parallel>], iteration_bounds = array<i64: 2>, scalar_prefetch = 0 : i64, scratch_operands = 1 : i64, tpu.core_type = #tpu.core_type<tc>, window_params = [{transform_indices = @transform_0, window_bounds = array<i64: 1, 16, 128>}, {pipeline_mode = #tpu.pipeline_mode<synchronous>, transform_indices = @transform_1, window_bounds = array<i64: 8, 36>}, {pipeline_mode = #tpu.pipeline_mode<synchronous>, transform_indices = @transform_2, window_bounds = array<i64: 8, 1>}, {transform_indices = @transform_3, window_bounds = array<i64: 1, 1, 8>}, {pipeline_mode = #tpu.pipeline_mode<synchronous>, transform_indices = @transform_4, window_bounds = array<i64: 72, 256>}, {transform_indices = @transform_5, window_bounds = array<i64: 1, 1, 256>}, {transform_indices = @transform_6, window_bounds = array<i64: 1, 1, 2>}]} {
    %c0 = arith.constant 0 : index
    %c0_0 = arith.constant 0 : index
    %c0_1 = arith.constant 0 : index
    %0 = vector.load %arg1[%c0, %c0_0, %c0_1] : memref<1x16x128xf32, #tpu.memory_space<vmem>>, vector<1x1x72xf32>
    %1 = vector.shape_cast %0 : vector<1x1x72xf32> to vector<1x72xf32>
    %c0_2 = arith.constant 0 : index
    %c0_3 = arith.constant 0 : index
    %2 = vector.load %arg8[%c0_2, %c0_3] : memref<36x72xf32, #tpu.memory_space<vmem>>, vector<1x72xf32>
    tpu.vector_store %arg8[%c0_2, %c0_3], %1 {strides = array<i32>} : memref<36x72xf32, #tpu.memory_space<vmem>>, vector<1x72xf32>,
    %c0_4 = arith.constant 0 : index
    %c1 = arith.constant 1 : index
    %c0_5 = arith.constant 0 : index
    %3 = vector.load %arg1[%c0_4, %c1, %c0_5] : memref<1x16x128xf32, #tpu.memory_space<vmem>>, vector<1x1x72xf32>
    %4 = vector.shape_cast %3 : vector<1x1x72xf32> to vector<1x72xf32>
    %c1_6 = arith.constant 1 : index
    %c0_7 = arith.constant 0 : index
    %5 = vector.load %arg8[%c1_6, %c0_7] : memref<36x72xf32, #tpu.memory_space<vmem>>, vector<1x72xf32>
    tpu.vector_store %arg8[%c1_6, %c0_7], %4 {strides = array<i32>} : memref<36x72xf32, #tpu.memory_space<vmem>>, vector<1x72xf32>,
    %c0_8 = arith.constant 0 : index
    %c2 = arith.constant 2 : index
    %c0_9 = arith.constant 0 : index
    %6 = vector.load %arg1[%c0_8, %c2, %c0_9] : memref<1x16x128xf32, #tpu.memory_space<vmem>>, vector<1x1x72xf32>
    %7 = vector.shape_cast %6 : vector<1x1x72xf32> to vector<1x72xf32>
    %c2_10 = arith.constant 2 : index
    %c0_11 = arith.constant 0 : index
    %8 = vector.load %arg8[%c2_10, %c0_11] : memref<36x72xf32, #tpu.memory_space<vmem>>, vector<1x72xf32>
    tpu.vector_store %arg8[%c2_10, %c0_11], %7 {strides = array<i32>} : memref<36x72xf32, #tpu.memory_space<vmem>>, vector<1x72xf32>,
    %c0_12 = arith.constant 0 : index
    %c3 = arith.constant 3 : index
    %c0_13 = arith.constant 0 : index
    %9 = vector.load %arg1[%c0_12, %c3, %c0_13] : memref<1x16x128xf32, #tpu.memory_space<vmem>>, vector<1x1x72xf32>
    %10 = vector.shape_cast %9 : vector<1x1x72xf32> to vector<1x72xf32>
    %c3_14 = arith.constant 3 : index
    %c0_15 = arith.constant 0 : index
    %11 = vector.load %arg8[%c3_14, %c0_15] : memref<36x72xf32, #tpu.memory_space<vmem>>, vector<1x72xf32>
    tpu.vector_store %arg8[%c3_14, %c0_15], %10 {strides = array<i32>} : memref<36x72xf32, #tpu.memory_space<vmem>>, vector<1x72xf32>,
    %c0_16 = arith.constant 0 : index
    %c4 = arith.constant 4 : index
    %c0_17 = arith.constant 0 : index
    %12 = vector.load %arg1[%c0_16, %c4, %c0_17] : memref<1x16x128xf32, #tpu.memory_space<vmem>>, vector<1x1x72xf32>
    %13 = vector.shape_cast %12 : vector<1x1x72xf32> to vector<1x72xf32>
    %c4_18 = arith.constant 4 : index
    %c0_19 = arith.constant 0 : index
    %14 = vector.load %arg8[%c4_18, %c0_19] : memref<36x72xf32, #tpu.memory_space<vmem>>, vector<1x72xf32>
    tpu.vector_store %arg8[%c4_18, %c0_19], %13 {strides = array<i32>} : memref<36x72xf32, #tpu.memory_space<vmem>>, vector<1x72xf32>,
    %c0_20 = arith.constant 0 : index
    %c5 = arith.constant 5 : index
    %c0_21 = arith.constant 0 : index
    %15 = vector.load %arg1[%c0_20, %c5, %c0_21] : memref<1x16x128xf32, #tpu.memory_space<vmem>>, vector<1x1x72xf32>
    %16 = vector.shape_cast %15 : vector<1x1x72xf32> to vector<1x72xf32>
    %c5_22 = arith.constant 5 : index
    %c0_23 = arith.constant 0 : index
    %17 = vector.load %arg8[%c5_22, %c0_23] : memref<36x72xf32, #tpu.memory_space<vmem>>, vector<1x72xf32>
    tpu.vector_store %arg8[%c5_22, %c0_23], %16 {strides = array<i32>} : memref<36x72xf32, #tpu.memory_space<vmem>>, vector<1x72xf32>,
    %c0_24 = arith.constant 0 : index
    %c6 = arith.constant 6 : index
    %c0_25 = arith.constant 0 : index
    %18 = vector.load %arg1[%c0_24, %c6, %c0_25] : memref<1x16x128xf32, #tpu.memory_space<vmem>>, vector<1x1x72xf32>
    %19 = vector.shape_cast %18 : vector<1x1x72xf32> to vector<1x72xf32>
    %c6_26 = arith.constant 6 : index
    %c0_27 = arith.constant 0 : index
    %20 = vector.load %arg8[%c6_26, %c0_27] : memref<36x72xf32, #tpu.memory_space<vmem>>, vector<1x72xf32>
    tpu.vector_store %arg8[%c6_26, %c0_27], %19 {strides = array<i32>} : memref<36x72xf32, #tpu.memory_space<vmem>>, vector<1x72xf32>,
    %c0_28 = arith.constant 0 : index
    %c7 = arith.constant 7 : index
    %c0_29 = arith.constant 0 : index
    %21 = vector.load %arg1[%c0_28, %c7, %c0_29] : memref<1x16x128xf32, #tpu.memory_space<vmem>>, vector<1x1x72xf32>
    %22 = vector.shape_cast %21 : vector<1x1x72xf32> to vector<1x72xf32>
    %c7_30 = arith.constant 7 : index
    %c0_31 = arith.constant 0 : index
    %23 = vector.load %arg8[%c7_30, %c0_31] : memref<36x72xf32, #tpu.memory_space<vmem>>, vector<1x72xf32>
    tpu.vector_store %arg8[%c7_30, %c0_31], %22 {strides = array<i32>} : memref<36x72xf32, #tpu.memory_space<vmem>>, vector<1x72xf32>,
    %c0_32 = arith.constant 0 : index
    %c0_33 = arith.constant 0 : index
    %c1_34 = arith.constant 1 : index
    %24 = vector.load %arg1[%c0_32, %c0_33, %c1_34] : memref<1x16x128xf32, #tpu.memory_space<vmem>>, vector<1x1x72xf32>
    %25 = vector.shape_cast %24 : vector<1x1x72xf32> to vector<1x72xf32>
    %c8 = arith.constant 8 : index
    %c0_35 = arith.constant 0 : index
    %26 = vector.load %arg8[%c8, %c0_35] : memref<36x72xf32, #tpu.memory_space<vmem>>, vector<1x72xf32>
    tpu.vector_store %arg8[%c8, %c0_35], %25 {strides = array<i32>} : memref<36x72xf32, #tpu.memory_space<vmem>>, vector<1x72xf32>,
    %c0_36 = arith.constant 0 : index
    %c1_37 = arith.constant 1 : index
    %c1_38 = arith.constant 1 : index
    %27 = vector.load %arg1[%c0_36, %c1_37, %c1_38] : memref<1x16x128xf32, #tpu.memory_space<vmem>>, vector<1x1x72xf32>
    %28 = vector.shape_cast %27 : vector<1x1x72xf32> to vector<1x72xf32>
    %c9 = arith.constant 9 : index
    %c0_39 = arith.constant 0 : index
    %29 = vector.load %arg8[%c9, %c0_39] : memref<36x72xf32, #tpu.memory_space<vmem>>, vector<1x72xf32>
    tpu.vector_store %arg8[%c9, %c0_39], %28 {strides = array<i32>} : memref<36x72xf32, #tpu.memory_space<vmem>>, vector<1x72xf32>,
    %c0_40 = arith.constant 0 : index
    %c2_41 = arith.constant 2 : index
    %c1_42 = arith.constant 1 : index
    %30 = vector.load %arg1[%c0_40, %c2_41, %c1_42] : memref<1x16x128xf32, #tpu.memory_space<vmem>>, vector<1x1x72xf32>
    %31 = vector.shape_cast %30 : vector<1x1x72xf32> to vector<1x72xf32>
    %c10 = arith.constant 10 : index
    %c0_43 = arith.constant 0 : index
    %32 = vector.load %arg8[%c10, %c0_43] : memref<36x72xf32, #tpu.memory_space<vmem>>, vector<1x72xf32>
    tpu.vector_store %arg8[%c10, %c0_43], %31 {strides = array<i32>} : memref<36x72xf32, #tpu.memory_space<vmem>>, vector<1x72xf32>,
    %c0_44 = arith.constant 0 : index
    %c3_45 = arith.constant 3 : index
    %c1_46 = arith.constant 1 : index
    %33 = vector.load %arg1[%c0_44, %c3_45, %c1_46] : memref<1x16x128xf32, #tpu.memory_space<vmem>>, vector<1x1x72xf32>
    %34 = vector.shape_cast %33 : vector<1x1x72xf32> to vector<1x72xf32>
    %c11 = arith.constant 11 : index
    %c0_47 = arith.constant 0 : index
    %35 = vector.load %arg8[%c11, %c0_47] : memref<36x72xf32, #tpu.memory_space<vmem>>, vector<1x72xf32>
    tpu.vector_store %arg8[%c11, %c0_47], %34 {strides = array<i32>} : memref<36x72xf32, #tpu.memory_space<vmem>>, vector<1x72xf32>,
    %c0_48 = arith.constant 0 : index
    %c8_49 = arith.constant 8 : index
    %c0_50 = arith.constant 0 : index
    %36 = vector.load %arg1[%c0_48, %c8_49, %c0_50] : memref<1x16x128xf32, #tpu.memory_space<vmem>>, vector<1x1x72xf32>
    %37 = vector.shape_cast %36 : vector<1x1x72xf32> to vector<1x72xf32>
    %c12 = arith.constant 12 : index
    %c0_51 = arith.constant 0 : index
    %38 = vector.load %arg8[%c12, %c0_51] : memref<36x72xf32, #tpu.memory_space<vmem>>, vector<1x72xf32>
    tpu.vector_store %arg8[%c12, %c0_51], %37 {strides = array<i32>} : memref<36x72xf32, #tpu.memory_space<vmem>>, vector<1x72xf32>,
    %c0_52 = arith.constant 0 : index
    %c9_53 = arith.constant 9 : index
    %c0_54 = arith.constant 0 : index
    %39 = vector.load %arg1[%c0_52, %c9_53, %c0_54] : memref<1x16x128xf32, #tpu.memory_space<vmem>>, vector<1x1x72xf32>
    %40 = vector.shape_cast %39 : vector<1x1x72xf32> to vector<1x72xf32>
    %c13 = arith.constant 13 : index
    %c0_55 = arith.constant 0 : index
    %41 = vector.load %arg8[%c13, %c0_55] : memref<36x72xf32, #tpu.memory_space<vmem>>, vector<1x72xf32>
    tpu.vector_store %arg8[%c13, %c0_55], %40 {strides = array<i32>} : memref<36x72xf32, #tpu.memory_space<vmem>>, vector<1x72xf32>,
    %c0_56 = arith.constant 0 : index
    %c10_57 = arith.constant 10 : index
    %c0_58 = arith.constant 0 : index
    %42 = vector.load %arg1[%c0_56, %c10_57, %c0_58] : memref<1x16x128xf32, #tpu.memory_space<vmem>>, vector<1x1x72xf32>
    %43 = vector.shape_cast %42 : vector<1x1x72xf32> to vector<1x72xf32>
    %c14 = arith.constant 14 : index
    %c0_59 = arith.constant 0 : index
    %44 = vector.load %arg8[%c14, %c0_59] : memref<36x72xf32, #tpu.memory_space<vmem>>, vector<1x72xf32>
    tpu.vector_store %arg8[%c14, %c0_59], %43 {strides = array<i32>} : memref<36x72xf32, #tpu.memory_space<vmem>>, vector<1x72xf32>,
    %c0_60 = arith.constant 0 : index
    %c11_61 = arith.constant 11 : index
    %c0_62 = arith.constant 0 : index
    %45 = vector.load %arg1[%c0_60, %c11_61, %c0_62] : memref<1x16x128xf32, #tpu.memory_space<vmem>>, vector<1x1x72xf32>
    %46 = vector.shape_cast %45 : vector<1x1x72xf32> to vector<1x72xf32>
    %c15 = arith.constant 15 : index
    %c0_63 = arith.constant 0 : index
    %47 = vector.load %arg8[%c15, %c0_63] : memref<36x72xf32, #tpu.memory_space<vmem>>, vector<1x72xf32>
    tpu.vector_store %arg8[%c15, %c0_63], %46 {strides = array<i32>} : memref<36x72xf32, #tpu.memory_space<vmem>>, vector<1x72xf32>,
    %c0_64 = arith.constant 0 : index
    %c12_65 = arith.constant 12 : index
    %c0_66 = arith.constant 0 : index
    %48 = vector.load %arg1[%c0_64, %c12_65, %c0_66] : memref<1x16x128xf32, #tpu.memory_space<vmem>>, vector<1x1x72xf32>
    %49 = vector.shape_cast %48 : vector<1x1x72xf32> to vector<1x72xf32>
    %c16 = arith.constant 16 : index
    %c0_67 = arith.constant 0 : index
    %50 = vector.load %arg8[%c16, %c0_67] : memref<36x72xf32, #tpu.memory_space<vmem>>, vector<1x72xf32>
    tpu.vector_store %arg8[%c16, %c0_67], %49 {strides = array<i32>} : memref<36x72xf32, #tpu.memory_space<vmem>>, vector<1x72xf32>,
    %c0_68 = arith.constant 0 : index
    %c13_69 = arith.constant 13 : index
    %c0_70 = arith.constant 0 : index
    %51 = vector.load %arg1[%c0_68, %c13_69, %c0_70] : memref<1x16x128xf32, #tpu.memory_space<vmem>>, vector<1x1x72xf32>
    %52 = vector.shape_cast %51 : vector<1x1x72xf32> to vector<1x72xf32>
    %c17 = arith.constant 17 : index
    %c0_71 = arith.constant 0 : index
    %53 = vector.load %arg8[%c17, %c0_71] : memref<36x72xf32, #tpu.memory_space<vmem>>, vector<1x72xf32>
    tpu.vector_store %arg8[%c17, %c0_71], %52 {strides = array<i32>} : memref<36x72xf32, #tpu.memory_space<vmem>>, vector<1x72xf32>,
    %c0_72 = arith.constant 0 : index
    %c14_73 = arith.constant 14 : index
    %c0_74 = arith.constant 0 : index
    %54 = vector.load %arg1[%c0_72, %c14_73, %c0_74] : memref<1x16x128xf32, #tpu.memory_space<vmem>>, vector<1x1x72xf32>
    %55 = vector.shape_cast %54 : vector<1x1x72xf32> to vector<1x72xf32>
    %c18 = arith.constant 18 : index
    %c0_75 = arith.constant 0 : index
    %56 = vector.load %arg8[%c18, %c0_75] : memref<36x72xf32, #tpu.memory_space<vmem>>, vector<1x72xf32>
    tpu.vector_store %arg8[%c18, %c0_75], %55 {strides = array<i32>} : memref<36x72xf32, #tpu.memory_space<vmem>>, vector<1x72xf32>,
    %c0_76 = arith.constant 0 : index
    %c15_77 = arith.constant 15 : index
    %c0_78 = arith.constant 0 : index
    %57 = vector.load %arg1[%c0_76, %c15_77, %c0_78] : memref<1x16x128xf32, #tpu.memory_space<vmem>>, vector<1x1x72xf32>
    %58 = vector.shape_cast %57 : vector<1x1x72xf32> to vector<1x72xf32>
    %c19 = arith.constant 19 : index
    %c0_79 = arith.constant 0 : index
    %59 = vector.load %arg8[%c19, %c0_79] : memref<36x72xf32, #tpu.memory_space<vmem>>, vector<1x72xf32>
    tpu.vector_store %arg8[%c19, %c0_79], %58 {strides = array<i32>} : memref<36x72xf32, #tpu.memory_space<vmem>>, vector<1x72xf32>,
    %c0_80 = arith.constant 0 : index
    %c8_81 = arith.constant 8 : index
    %c1_82 = arith.constant 1 : index
    %60 = vector.load %arg1[%c0_80, %c8_81, %c1_82] : memref<1x16x128xf32, #tpu.memory_space<vmem>>, vector<1x1x72xf32>
    %61 = vector.shape_cast %60 : vector<1x1x72xf32> to vector<1x72xf32>
    %c20 = arith.constant 20 : index
    %c0_83 = arith.constant 0 : index
    %62 = vector.load %arg8[%c20, %c0_83] : memref<36x72xf32, #tpu.memory_space<vmem>>, vector<1x72xf32>
    tpu.vector_store %arg8[%c20, %c0_83], %61 {strides = array<i32>} : memref<36x72xf32, #tpu.memory_space<vmem>>, vector<1x72xf32>,
    %c0_84 = arith.constant 0 : index
    %c9_85 = arith.constant 9 : index
    %c1_86 = arith.constant 1 : index
    %63 = vector.load %arg1[%c0_84, %c9_85, %c1_86] : memref<1x16x128xf32, #tpu.memory_space<vmem>>, vector<1x1x72xf32>
    %64 = vector.shape_cast %63 : vector<1x1x72xf32> to vector<1x72xf32>
    %c21 = arith.constant 21 : index
    %c0_87 = arith.constant 0 : index
    %65 = vector.load %arg8[%c21, %c0_87] : memref<36x72xf32, #tpu.memory_space<vmem>>, vector<1x72xf32>
    tpu.vector_store %arg8[%c21, %c0_87], %64 {strides = array<i32>} : memref<36x72xf32, #tpu.memory_space<vmem>>, vector<1x72xf32>,
    %c0_88 = arith.constant 0 : index
    %c10_89 = arith.constant 10 : index
    %c1_90 = arith.constant 1 : index
    %66 = vector.load %arg1[%c0_88, %c10_89, %c1_90] : memref<1x16x128xf32, #tpu.memory_space<vmem>>, vector<1x1x72xf32>
    %67 = vector.shape_cast %66 : vector<1x1x72xf32> to vector<1x72xf32>
    %c22 = arith.constant 22 : index
    %c0_91 = arith.constant 0 : index
    %68 = vector.load %arg8[%c22, %c0_91] : memref<36x72xf32, #tpu.memory_space<vmem>>, vector<1x72xf32>
    tpu.vector_store %arg8[%c22, %c0_91], %67 {strides = array<i32>} : memref<36x72xf32, #tpu.memory_space<vmem>>, vector<1x72xf32>,
    %c0_92 = arith.constant 0 : index
    %c11_93 = arith.constant 11 : index
    %c1_94 = arith.constant 1 : index
    %69 = vector.load %arg1[%c0_92, %c11_93, %c1_94] : memref<1x16x128xf32, #tpu.memory_space<vmem>>, vector<1x1x72xf32>
    %70 = vector.shape_cast %69 : vector<1x1x72xf32> to vector<1x72xf32>
    %c23 = arith.constant 23 : index
    %c0_95 = arith.constant 0 : index
    %71 = vector.load %arg8[%c23, %c0_95] : memref<36x72xf32, #tpu.memory_space<vmem>>, vector<1x72xf32>
    tpu.vector_store %arg8[%c23, %c0_95], %70 {strides = array<i32>} : memref<36x72xf32, #tpu.memory_space<vmem>>, vector<1x72xf32>,
    %c0_96 = arith.constant 0 : index
    %c0_97 = arith.constant 0 : index
    %c9_98 = arith.constant 9 : index
    %72 = vector.load %arg1[%c0_96, %c0_97, %c9_98] : memref<1x16x128xf32, #tpu.memory_space<vmem>>, vector<1x1x72xf32>
    %73 = vector.shape_cast %72 : vector<1x1x72xf32> to vector<1x72xf32>
    %c24 = arith.constant 24 : index
    %c0_99 = arith.constant 0 : index
    %74 = vector.load %arg8[%c24, %c0_99] : memref<36x72xf32, #tpu.memory_space<vmem>>, vector<1x72xf32>
    tpu.vector_store %arg8[%c24, %c0_99], %73 {strides = array<i32>} : memref<36x72xf32, #tpu.memory_space<vmem>>, vector<1x72xf32>,
    %c0_100 = arith.constant 0 : index
    %c1_101 = arith.constant 1 : index
    %c9_102 = arith.constant 9 : index
    %75 = vector.load %arg1[%c0_100, %c1_101, %c9_102] : memref<1x16x128xf32, #tpu.memory_space<vmem>>, vector<1x1x72xf32>
    %76 = vector.shape_cast %75 : vector<1x1x72xf32> to vector<1x72xf32>
    %c25 = arith.constant 25 : index
    %c0_103 = arith.constant 0 : index
    %77 = vector.load %arg8[%c25, %c0_103] : memref<36x72xf32, #tpu.memory_space<vmem>>, vector<1x72xf32>
    tpu.vector_store %arg8[%c25, %c0_103], %76 {strides = array<i32>} : memref<36x72xf32, #tpu.memory_space<vmem>>, vector<1x72xf32>,
    %c0_104 = arith.constant 0 : index
    %c2_105 = arith.constant 2 : index
    %c9_106 = arith.constant 9 : index
    %78 = vector.load %arg1[%c0_104, %c2_105, %c9_106] : memref<1x16x128xf32, #tpu.memory_space<vmem>>, vector<1x1x72xf32>
    %79 = vector.shape_cast %78 : vector<1x1x72xf32> to vector<1x72xf32>
    %c26 = arith.constant 26 : index
    %c0_107 = arith.constant 0 : index
    %80 = vector.load %arg8[%c26, %c0_107] : memref<36x72xf32, #tpu.memory_space<vmem>>, vector<1x72xf32>
    tpu.vector_store %arg8[%c26, %c0_107], %79 {strides = array<i32>} : memref<36x72xf32, #tpu.memory_space<vmem>>, vector<1x72xf32>,
    %c0_108 = arith.constant 0 : index
    %c3_109 = arith.constant 3 : index
    %c9_110 = arith.constant 9 : index
    %81 = vector.load %arg1[%c0_108, %c3_109, %c9_110] : memref<1x16x128xf32, #tpu.memory_space<vmem>>, vector<1x1x72xf32>
    %82 = vector.shape_cast %81 : vector<1x1x72xf32> to vector<1x72xf32>
    %c27 = arith.constant 27 : index
    %c0_111 = arith.constant 0 : index
    %83 = vector.load %arg8[%c27, %c0_111] : memref<36x72xf32, #tpu.memory_space<vmem>>, vector<1x72xf32>
    tpu.vector_store %arg8[%c27, %c0_111], %82 {strides = array<i32>} : memref<36x72xf32, #tpu.memory_space<vmem>>, vector<1x72xf32>,
    %c0_112 = arith.constant 0 : index
    %c4_113 = arith.constant 4 : index
    %c9_114 = arith.constant 9 : index
    %84 = vector.load %arg1[%c0_112, %c4_113, %c9_114] : memref<1x16x128xf32, #tpu.memory_space<vmem>>, vector<1x1x72xf32>
    %85 = vector.shape_cast %84 : vector<1x1x72xf32> to vector<1x72xf32>
    %c28 = arith.constant 28 : index
    %c0_115 = arith.constant 0 : index
    %86 = vector.load %arg8[%c28, %c0_115] : memref<36x72xf32, #tpu.memory_space<vmem>>, vector<1x72xf32>
    tpu.vector_store %arg8[%c28, %c0_115], %85 {strides = array<i32>} : memref<36x72xf32, #tpu.memory_space<vmem>>, vector<1x72xf32>,
    %c0_116 = arith.constant 0 : index
    %c5_117 = arith.constant 5 : index
    %c9_118 = arith.constant 9 : index
    %87 = vector.load %arg1[%c0_116, %c5_117, %c9_118] : memref<1x16x128xf32, #tpu.memory_space<vmem>>, vector<1x1x72xf32>
    %88 = vector.shape_cast %87 : vector<1x1x72xf32> to vector<1x72xf32>
    %c29 = arith.constant 29 : index
    %c0_119 = arith.constant 0 : index
    %89 = vector.load %arg8[%c29, %c0_119] : memref<36x72xf32, #tpu.memory_space<vmem>>, vector<1x72xf32>
    tpu.vector_store %arg8[%c29, %c0_119], %88 {strides = array<i32>} : memref<36x72xf32, #tpu.memory_space<vmem>>, vector<1x72xf32>,
    %c0_120 = arith.constant 0 : index
    %c6_121 = arith.constant 6 : index
    %c9_122 = arith.constant 9 : index
    %90 = vector.load %arg1[%c0_120, %c6_121, %c9_122] : memref<1x16x128xf32, #tpu.memory_space<vmem>>, vector<1x1x72xf32>
    %91 = vector.shape_cast %90 : vector<1x1x72xf32> to vector<1x72xf32>
    %c30 = arith.constant 30 : index
    %c0_123 = arith.constant 0 : index
    %92 = vector.load %arg8[%c30, %c0_123] : memref<36x72xf32, #tpu.memory_space<vmem>>, vector<1x72xf32>
    tpu.vector_store %arg8[%c30, %c0_123], %91 {strides = array<i32>} : memref<36x72xf32, #tpu.memory_space<vmem>>, vector<1x72xf32>,
    %c0_124 = arith.constant 0 : index
    %c7_125 = arith.constant 7 : index
    %c9_126 = arith.constant 9 : index
    %93 = vector.load %arg1[%c0_124, %c7_125, %c9_126] : memref<1x16x128xf32, #tpu.memory_space<vmem>>, vector<1x1x72xf32>
    %94 = vector.shape_cast %93 : vector<1x1x72xf32> to vector<1x72xf32>
    %c31 = arith.constant 31 : index
    %c0_127 = arith.constant 0 : index
    %95 = vector.load %arg8[%c31, %c0_127] : memref<36x72xf32, #tpu.memory_space<vmem>>, vector<1x72xf32>
    tpu.vector_store %arg8[%c31, %c0_127], %94 {strides = array<i32>} : memref<36x72xf32, #tpu.memory_space<vmem>>, vector<1x72xf32>,
    %c0_128 = arith.constant 0 : index
    %c0_129 = arith.constant 0 : index
    %c10_130 = arith.constant 10 : index
    %96 = vector.load %arg1[%c0_128, %c0_129, %c10_130] : memref<1x16x128xf32, #tpu.memory_space<vmem>>, vector<1x1x72xf32>
    %97 = vector.shape_cast %96 : vector<1x1x72xf32> to vector<1x72xf32>
    %c32 = arith.constant 32 : index
    %c0_131 = arith.constant 0 : index
    %98 = vector.load %arg8[%c32, %c0_131] : memref<36x72xf32, #tpu.memory_space<vmem>>, vector<1x72xf32>
    tpu.vector_store %arg8[%c32, %c0_131], %97 {strides = array<i32>} : memref<36x72xf32, #tpu.memory_space<vmem>>, vector<1x72xf32>,
    %c0_132 = arith.constant 0 : index
    %c1_133 = arith.constant 1 : index
    %c10_134 = arith.constant 10 : index
    %99 = vector.load %arg1[%c0_132, %c1_133, %c10_134] : memref<1x16x128xf32, #tpu.memory_space<vmem>>, vector<1x1x72xf32>
    %100 = vector.shape_cast %99 : vector<1x1x72xf32> to vector<1x72xf32>
    %c33 = arith.constant 33 : index
    %c0_135 = arith.constant 0 : index
    %101 = vector.load %arg8[%c33, %c0_135] : memref<36x72xf32, #tpu.memory_space<vmem>>, vector<1x72xf32>
    tpu.vector_store %arg8[%c33, %c0_135], %100 {strides = array<i32>} : memref<36x72xf32, #tpu.memory_space<vmem>>, vector<1x72xf32>,
    %c0_136 = arith.constant 0 : index
    %c2_137 = arith.constant 2 : index
    %c10_138 = arith.constant 10 : index
    %102 = vector.load %arg1[%c0_136, %c2_137, %c10_138] : memref<1x16x128xf32, #tpu.memory_space<vmem>>, vector<1x1x72xf32>
    %103 = vector.shape_cast %102 : vector<1x1x72xf32> to vector<1x72xf32>
    %c34 = arith.constant 34 : index
    %c0_139 = arith.constant 0 : index
    %104 = vector.load %arg8[%c34, %c0_139] : memref<36x72xf32, #tpu.memory_space<vmem>>, vector<1x72xf32>
    tpu.vector_store %arg8[%c34, %c0_139], %103 {strides = array<i32>} : memref<36x72xf32, #tpu.memory_space<vmem>>, vector<1x72xf32>,
    %c0_140 = arith.constant 0 : index
    %c3_141 = arith.constant 3 : index
    %c10_142 = arith.constant 10 : index
    %105 = vector.load %arg1[%c0_140, %c3_141, %c10_142] : memref<1x16x128xf32, #tpu.memory_space<vmem>>, vector<1x1x72xf32>
    %106 = vector.shape_cast %105 : vector<1x1x72xf32> to vector<1x72xf32>
    %c35 = arith.constant 35 : index
    %c0_143 = arith.constant 0 : index
    %107 = vector.load %arg8[%c35, %c0_143] : memref<36x72xf32, #tpu.memory_space<vmem>>, vector<1x72xf32>
    tpu.vector_store %arg8[%c35, %c0_143], %106 {strides = array<i32>} : memref<36x72xf32, #tpu.memory_space<vmem>>, vector<1x72xf32>,
    %c0_144 = arith.constant 0 : index
    %c0_145 = arith.constant 0 : index
    %108 = vector.load %arg2[%c0_144, %c0_145] : memref<8x36xf32, #tpu.memory_space<vmem>>, vector<8x36xf32>
    %c0_146 = arith.constant 0 : index
    %c0_147 = arith.constant 0 : index
    %109 = vector.load %arg8[%c0_146, %c0_147] : memref<36x72xf32, #tpu.memory_space<vmem>>, vector<36x72xf32>
    %cst = arith.constant dense<0.000000e+00> : vector<8x72xf32>
    %110 = tpu.matmul %108, %109, %cst {dimension_numbers = #tpu.dot_dimension_numbers<[1], [0], [0], [1], [0, 0, 1, 1], [], []>} : vector<8x36xf32>, vector<36x72xf32>, vector<8x72xf32> -> vector<8x72xf32>
    %c0_148 = arith.constant 0 : index
    %c0_149 = arith.constant 0 : index
    %111 = vector.load %arg3[%c0_148, %c0_149] : memref<8x1xf32, #tpu.memory_space<vmem>>, vector<8x1xf32>
    %112 = vector.broadcast %111 : vector<8x1xf32> to vector<8x72xf32>
    %113 = arith.addf %110, %112 : vector<8x72xf32>
    %cst_150 = arith.constant 0.000000e+00 : f32
    %114 = vector.broadcast %cst_150 : f32 to vector<8x72xf32>
    %115 = arith.maximumf %113, %114 : vector<8x72xf32>
    %c0_151 = arith.constant 0 : index
    %c0_152 = arith.constant 0 : index
    %c0_153 = arith.constant 0 : index
    %116 = vector.load %arg4[%c0_151, %c0_152, %c0_153] : memref<1x1x8xf32, #tpu.memory_space<vmem>>, vector<1x1x8xf32>
    %117 = vector.shape_cast %116 : vector<1x1x8xf32> to vector<1x8xf32>
    %cst_154 = arith.constant dense<0.000000e+00> : vector<1x72xf32>
    %118 = tpu.matmul %117, %115, %cst_154 {dimension_numbers = #tpu.dot_dimension_numbers<[1], [0], [0], [1], [0, 0, 1, 1], [], []>} : vector<1x8xf32>, vector<8x72xf32>, vector<1x72xf32> -> vector<1x72xf32>
    %cst_155 = arith.constant 0.000000e+00 : f32
    %119 = vector.broadcast %cst_155 : f32 to vector<1x72xf32>
    %120 = arith.maximumf %118, %119 : vector<1x72xf32>
    %c0_156 = arith.constant 0 : index
    %c0_157 = arith.constant 0 : index
    %121 = vector.load %arg5[%c0_156, %c0_157] : memref<72x256xf32, #tpu.memory_space<vmem>>, vector<72x256xf32>
    %cst_158 = arith.constant dense<0.000000e+00> : vector<1x256xf32>
    %122 = tpu.matmul %120, %121, %cst_158 {dimension_numbers = #tpu.dot_dimension_numbers<[1], [0], [0], [1], [0, 0, 1, 1], [], []>} : vector<1x72xf32>, vector<72x256xf32>, vector<1x256xf32> -> vector<1x256xf32>
    %c0_159 = arith.constant 0 : index
    %c0_160 = arith.constant 0 : index
    %c0_161 = arith.constant 0 : index
    %123 = vector.load %arg6[%c0_159, %c0_160, %c0_161] : memref<1x1x256xf32, #tpu.memory_space<vmem>>, vector<1x1x256xf32>
    %124 = vector.shape_cast %123 : vector<1x1x256xf32> to vector<1x256xf32>
    %125 = vector.shape_cast %122 : vector<1x256xf32> to vector<1x1x256xf32>
    tpu.vector_store %arg6[%c0_159, %c0_160, %c0_161], %125 {strides = array<i32>} : memref<1x1x256xf32, #tpu.memory_space<vmem>>, vector<1x1x256xf32>,
    %cst_162 = arith.constant dense<0x7F800000> : vector<1xf32>
    %126 = vector.multi_reduction <minimumf>, %122, %cst_162 [1] : vector<1x256xf32> to vector<1xf32>
    %127 = vector.shape_cast %126 : vector<1xf32> to vector<1x1xf32>
    %cst_163 = arith.constant dense<0xFF800000> : vector<1xf32>
    %128 = vector.multi_reduction <maximumf>, %122, %cst_163 [1] : vector<1x256xf32> to vector<1xf32>
    %129 = vector.shape_cast %128 : vector<1xf32> to vector<1x1xf32>
    %130 = tpu.concatenate %127, %129 in 1 : vector<1x1xf32>, vector<1x1xf32> -> vector<1x2xf32>
    %c0_164 = arith.constant 0 : index
    %c0_165 = arith.constant 0 : index
    %c0_166 = arith.constant 0 : index
    %131 = vector.load %arg7[%c0_164, %c0_165, %c0_166] : memref<1x1x2xf32, #tpu.memory_space<vmem>>, vector<1x1x2xf32>
    %132 = vector.shape_cast %131 : vector<1x1x2xf32> to vector<1x2xf32>
    %133 = vector.shape_cast %130 : vector<1x2xf32> to vector<1x1x2xf32>
    tpu.vector_store %arg7[%c0_164, %c0_165, %c0_166], %133 {strides = array<i32>} : memref<1x1x2xf32, #tpu.memory_space<vmem>>, vector<1x1x2xf32>,
    return
  }
  func.func @transform_0(%arg0: i32) -> (i32, i32, i32) {
    %c0_i32 = arith.constant 0 : i32
    %c0_i32_0 = arith.constant 0 : i32
    %c0_i32_1 = arith.constant 0 : i32
    return %arg0, %c0_i32, %c0_i32_0 : i32, i32, i32
  }
  func.func @transform_1(%arg0: i32) -> (i32, i32) {
    %c0_i32 = arith.constant 0 : i32
    %c0_i32_0 = arith.constant 0 : i32
    %c0_i32_1 = arith.constant 0 : i32
    return %c0_i32, %c0_i32_0 : i32, i32
  }
  func.func @transform_2(%arg0: i32) -> (i32, i32) {
    %c0_i32 = arith.constant 0 : i32
    %c0_i32_0 = arith.constant 0 : i32
    %c0_i32_1 = arith.constant 0 : i32
    return %c0_i32, %c0_i32_0 : i32, i32
  }
  func.func @transform_3(%arg0: i32) -> (i32, i32, i32) {
    %c0_i32 = arith.constant 0 : i32
    %c0_i32_0 = arith.constant 0 : i32
    %c0_i32_1 = arith.constant 0 : i32
    return %arg0, %c0_i32, %c0_i32_0 : i32, i32, i32
  }
  func.func @transform_4(%arg0: i32) -> (i32, i32) {
    %c0_i32 = arith.constant 0 : i32
    %c0_i32_0 = arith.constant 0 : i32
    %c0_i32_1 = arith.constant 0 : i32
    return %c0_i32, %c0_i32_0 : i32, i32
  }
  func.func @transform_5(%arg0: i32) -> (i32, i32, i32) {
    %c0_i32 = arith.constant 0 : i32
    %c0_i32_0 = arith.constant 0 : i32
    %c0_i32_1 = arith.constant 0 : i32
    return %arg0, %c0_i32, %c0_i32_0 : i32, i32, i32
  }
  func.func @transform_6(%arg0: i32) -> (i32, i32, i32) {
    %c0_i32 = arith.constant 0 : i32
    %c0_i32_0 = arith.constant 0 : i32
    %c0_i32_1 = arith.constant 0 : i32
    return %arg0, %c0_i32, %c0_i32_0 : i32, i32, i32
  }
}

</mosaic_0001>

<llo_original>
// kernel: gradcam_forward.1
$region0: #{gradcam_forward.1}
  #allocation0 [shape = 'u32[]', space=smem, size = 0x4, offset = 0x4, fixed_abs, tag = 'smem constant byte address 0x4 - core index']
  #allocation1 [shape = 'u32[144,128]{1,0:T(1,128)}', space=vmem, size = 0x12000, scoped, tag = 'internal scratch']
  #allocation2 [shape = 'f32[36,72]{1,0:T(8,128)}', space=vmem, size = 0x5000, scoped, tag = 'scratch operand']
  %s0 = inlined_call_operand.vmem [shape: f32[2,16,128], index: 0, kind: input, shape index: {}]
  %s1 = inlined_call_operand.vmem [shape: f32[8,36], index: 1, kind: input, shape index: {}]
  %s2 = inlined_call_operand.vmem [shape: f32[8,1], index: 2, kind: input, shape index: {}]
  %s3 = inlined_call_operand.vmem [shape: f32[2,1,8], index: 3, kind: input, shape index: {}]
  %s4 = inlined_call_operand.vmem [shape: f32[72,256], index: 4, kind: input, shape index: {}]
  %s5 = inlined_call_operand.vmem [shape: f32[2,1,256], index: 5, kind: output, shape index: {0}]
  %s6 = inlined_call_operand.vmem [shape: f32[2,1,2], index: 6, kind: output, shape index: {1}]
  %7 = xla_tuple %s5, %s6
  %s8 = sld [smem:[#allocation0]]
  $region61: #{gradcam_forward.1} parent=0
    _
  %s10 = ssub.s32 1, %s8
  %s11 = scalar_select 0, %s10, %s8
  loop: start=0, step=1, limit=4
  $region2: #{gradcam_forward.1} parent=0 // loop_pre_header
    _
  $region3: #{gradcam_forward.1} parent=0 // loop_header
    %s13 = sphi 0, %s17
    %p14 = scmp.ge.s32.totalorder %s13, 4
    %s23 = sphi 0, %s25
    %s26 = sphi 0, %s23
    %s27 = sphi 0, %s26
    %s43 = sphi 0, %s27
    %s47 = sphi 0, %s47
    %s49 = sphi 0, %s47
    %s50 = sphi 0, %s49
    %s64 = sphi 0, %s50
    %s68 = sphi 0, %s68
    %s70 = sphi 0, %s68
    %s71 = sphi 0, %s70
    %s85 = sphi 0, %s71
    %s91 = sphi 0, %s93
    %s94 = sphi 0, %s91
    %s95 = sphi 0, %s94
    %s111 = sphi 0, %s95
    %s115 = sphi 0, %s115
    %s117 = sphi 0, %s115
    %s118 = sphi 0, %s117
    %s132 = sphi 0, %s118
    %s138 = sphi 0, %s140
    %s141 = sphi 0, %s138
    %s142 = sphi 0, %s141
    %s158 = sphi 0, %s142
    %s164 = sphi 0, %s166
    %s167 = sphi 0, %s164
    %s168 = sphi 0, %s167
    %s184 = sphi 0, %s168
  $region4: #{gradcam_forward.1} parent=0 // loop_header_branch
    %16 = sbr.rel (%p14) target = $region8
  $region5: #{gradcam_forward.1} parent=0 // loop_body
    %s18 = ssub.s32 %s13, 1
    %s19 = ssub.s32 %s13, 2
    %s20 = sadd.s32 %s13, 1
    %s21 = ssub.s32 %s13, %s20
    %p22 = scmp.eq.s32.totalorder %s21, 0
    %s24 = sadd.s32 %s23, 1
    %s25 = scalar_select %p22, %s23, %s24
    %p28 = pneg %p22
    %p29 = scmp.eq.s32.totalorder %s13, 1
    %p30 = por %p28, %p29
    %p31 = scmp.ne.s32.totalorder %s23, %s26
    %p32 = scmp.eq.s32.totalorder %s13, 0
    %p33 = por %p31, %p32
    %p34 = scmp.ne.s32.totalorder %s23, %s26
    %p35 = scmp.eq.s32.totalorder %s18, 1
    %p36 = por %p34, %p35
    %p37 = scmp.ne.s32.totalorder %s26, %s27
    %p38 = scmp.eq.s32.totalorder %s18, 0
    %p39 = por %p37, %p38
    %p40 = scmp.ne.s32.totalorder %s26, %s27
    %p41 = scmp.eq.s32.totalorder %s19, 1
    %p42 = por %p40, %p41
    %p44 = scmp.ne.s32.totalorder %s27, %s43
    %p45 = scmp.eq.s32.totalorder %s19, 0
    %p46 = por %p44, %p45
    %s48 = sadd.s32 %s47, 1
    %p51 = scmp.eq.s32.totalorder %s13, 1
    %p52 = scmp.ne.s32.totalorder %s47, %s49
    %p53 = scmp.eq.s32.totalorder %s13, 0
    %p54 = por %p52, %p53
    %p55 = scmp.ne.s32.totalorder %s47, %s49
    %p56 = scmp.eq.s32.totalorder %s18, 1
    %p57 = por %p55, %p56
    %p58 = scmp.ne.s32.totalorder %s49, %s50
    %p59 = scmp.eq.s32.totalorder %s18, 0
    %p60 = por %p58, %p59
    %p61 = scmp.ne.s32.totalorder %s49, %s50
    %p62 = scmp.eq.s32.totalorder %s19, 1
    %p63 = por %p61, %p62
    %p65 = scmp.ne.s32.totalorder %s50, %s64
    %p66 = scmp.eq.s32.totalorder %s19, 0
    %p67 = por %p65, %p66
    %s69 = sadd.s32 %s68, 1
    %p72 = scmp.eq.s32.totalorder %s13, 1
    %p73 = scmp.ne.s32.totalorder %s68, %s70
    %p74 = scmp.eq.s32.totalorder %s13, 0
    %p75 = por %p73, %p74
    %p76 = scmp.ne.s32.totalorder %s68, %s70
    %p77 = scmp.eq.s32.totalorder %s18, 1
    %p78 = por %p76, %p77
    %p79 = scmp.ne.s32.totalorder %s70, %s71
    %p80 = scmp.eq.s32.totalorder %s18, 0
    %p81 = por %p79, %p80
    %p82 = scmp.ne.s32.totalorder %s70, %s71
    %p83 = scmp.eq.s32.totalorder %s19, 1
    %p84 = por %p82, %p83
    %p86 = scmp.ne.s32.totalorder %s71, %s85
    %p87 = scmp.eq.s32.totalorder %s19, 0
    %p88 = por %p86, %p87
    %s89 = ssub.s32 %s13, %s20
    %p90 = scmp.eq.s32.totalorder %s89, 0
    %s92 = sadd.s32 %s91, 1
    %s93 = scalar_select %p90, %s91, %s92
    %p96 = pneg %p90
    %p97 = scmp.eq.s32.totalorder %s13, 1
    %p98 = por %p96, %p97
    %p99 = scmp.ne.s32.totalorder %s91, %s94
    %p100 = scmp.eq.s32.totalorder %s13, 0
    %p101 = por %p99, %p100
    %p102 = scmp.ne.s32.totalorder %s91, %s94
    %p103 = scmp.eq.s32.totalorder %s18, 1
    %p104 = por %p102, %p103
    %p105 = scmp.ne.s32.totalorder %s94, %s95
    %p106 = scmp.eq.s32.totalorder %s18, 0
    %p107 = por %p105, %p106
    %p108 = scmp.ne.s32.totalorder %s94, %s95
    %p109 = scmp.eq.s32.totalorder %s19, 1
    %p110 = por %p108, %p109
    %p112 = scmp.ne.s32.totalorder %s95, %s111
    %p113 = scmp.eq.s32.totalorder %s19, 0
    %p114 = por %p112, %p113
    %s116 = sadd.s32 %s115, 1
    %p119 = scmp.eq.s32.totalorder %s13, 1
    %p120 = scmp.ne.s32.totalorder %s115, %s117
    %p121 = scmp.eq.s32.totalorder %s13, 0
    %p122 = por %p120, %p121
    %p123 = scmp.ne.s32.totalorder %s115, %s117
    %p124 = scmp.eq.s32.totalorder %s18, 1
    %p125 = por %p123, %p124
    %p126 = scmp.ne.s32.totalorder %s117, %s118
    %p127 = scmp.eq.s32.totalorder %s18, 0
    %p128 = por %p126, %p127
    %p129 = scmp.ne.s32.totalorder %s117, %s118
    %p130 = scmp.eq.s32.totalorder %s19, 1
    %p131 = por %p129, %p130
    %p133 = scmp.ne.s32.totalorder %s118, %s132
    %p134 = scmp.eq.s32.totalorder %s19, 0
    %p135 = por %p133, %p134
    %s136 = ssub.s32 %s13, %s20
    %p137 = scmp.eq.s32.totalorder %s136, 0
    %s139 = sadd.s32 %s138, 1
    %s140 = scalar_select %p137, %s138, %s139
    %p143 = pneg %p137
    %p144 = scmp.eq.s32.totalorder %s13, 1
    %p145 = por %p143, %p144
    %p146 = scmp.ne.s32.totalorder %s138, %s141
    %p147 = scmp.eq.s32.totalorder %s13, 0
    %p148 = por %p146, %p147
    %p149 = scmp.ne.s32.totalorder %s138, %s141
    %p150 = scmp.eq.s32.totalorder %s18, 1
    %p151 = por %p149, %p150
    %p152 = scmp.ne.s32.totalorder %s141, %s142
    %p153 = scmp.eq.s32.totalorder %s18, 0
    %p154 = por %p152, %p153
    %p155 = scmp.ne.s32.totalorder %s141, %s142
    %p156 = scmp.eq.s32.totalorder %s19, 1
    %p157 = por %p155, %p156
    %p159 = scmp.ne.s32.totalorder %s142, %s158
    %p160 = scmp.eq.s32.totalorder %s19, 0
    %p161 = por %p159, %p160
    %s162 = ssub.s32 %s13, %s20
    %p163 = scmp.eq.s32.totalorder %s162, 0
    %s165 = sadd.s32 %s164, 1
    %s166 = scalar_select %p163, %s164, %s165
    %p169 = pneg %p163
    %p170 = scmp.eq.s32.totalorder %s13, 1
    %p171 = por %p169, %p170
    %p172 = scmp.ne.s32.totalorder %s164, %s167
    %p173 = scmp.eq.s32.totalorder %s13, 0
    %p174 = por %p172, %p173
    %p175 = scmp.ne.s32.totalorder %s164, %s167
    %p176 = scmp.eq.s32.totalorder %s18, 1
    %p177 = por %p175, %p176
    %p178 = scmp.ne.s32.totalorder %s167, %s168
    %p179 = scmp.eq.s32.totalorder %s18, 0
    %p180 = por %p178, %p179
    %p181 = scmp.ne.s32.totalorder %s167, %s168
    %p182 = scmp.eq.s32.totalorder %s19, 1
    %p183 = por %p181, %p182
    %p185 = scmp.ne.s32.totalorder %s168, %s184
    %p186 = scmp.eq.s32.totalorder %s19, 0
    %p187 = por %p185, %p186
    %p188 = scmp.le.s32.totalorder 1, %s13
    %p189 = scmp.lt.s32.totalorder %s13, 3
    %p190 = pnand %p188, %p189
    %p191 = pneg %p190
    // Predicated region
    $region9: #{gradcam_forward.1} parent=5 // pred_check
      _
    $region10: #{gradcam_forward.1} parent=5 // pred_check_branch
      %193 = sbr.rel (%p190) target = $region12
    $region11: #{gradcam_forward.1} parent=5 // pred_region
      %s194 = ssub.s32 %s13, 1
      // Predicated region
      $region13: #{gradcam_forward.1} parent=11 // pred_check
        %p195 = pneg %p60
      $region14: #{gradcam_forward.1} parent=11 // pred_check_branch
        %197 = sbr.rel (%p195) target = $region16
      $region15: #{gradcam_forward.1} parent=11 // pred_region
        _
      $region16: #{gradcam_forward.1} parent=11 // pred_fallthru
        _
      // Predicated region
      $region17: #{gradcam_forward.1} parent=11 // pred_check
        %p198 = pneg %p81
      $region18: #{gradcam_forward.1} parent=11 // pred_check_branch
        %200 = sbr.rel (%p198) target = $region20
      $region19: #{gradcam_forward.1} parent=11 // pred_region
        _
      $region20: #{gradcam_forward.1} parent=11 // pred_fallthru
        _
      // Predicated region
      $region21: #{gradcam_forward.1} parent=11 // pred_check
        %p201 = pneg %p128
      $region22: #{gradcam_forward.1} parent=11 // pred_check_branch
        %203 = sbr.rel (%p201) target = $region24
      $region23: #{gradcam_forward.1} parent=11 // pred_region
        _
      $region24: #{gradcam_forward.1} parent=11 // pred_fallthru
        _
    $region12: #{gradcam_forward.1} parent=5 // pred_fallthru
      _
    %p204 = scmp.lt.s32.totalorder %s13, 2
    // Predicated region
    $region25: #{gradcam_forward.1} parent=5 // pred_check
      %p205 = pneg %p204
    $region26: #{gradcam_forward.1} parent=5 // pred_check_branch
      %207 = sbr.rel (%p205) target = $region28
    $region27: #{gradcam_forward.1} parent=5 // pred_region
      // Predicated region
      $region29: #{gradcam_forward.1} parent=27 // pred_check
        %p208 = pneg %p33
      $region30: #{gradcam_forward.1} parent=27 // pred_check_branch
        %210 = sbr.rel (%p208) target = $region32
      $region31: #{gradcam_forward.1} parent=27 // pred_region
        %p211 = scmp.lt.s32.totalorder %s13, 1
        %s212 = scalar_select %p211, %s13, 1
        %s213 = smul.addr %s212, 2
        %s214 = smul.addr %s213, 8
        %s215 = scalar_lea.vmem %s0, %s214
      $region32: #{gradcam_forward.1} parent=27 // pred_fallthru
        _
      // Predicated region
      $region33: #{gradcam_forward.1} parent=27 // pred_check
        %p216 = pneg %p101
      $region34: #{gradcam_forward.1} parent=27 // pred_check_branch
        %218 = sbr.rel (%p216) target = $region36
      $region35: #{gradcam_forward.1} parent=27 // pred_region
        %p219 = scmp.lt.s32.totalorder %s13, 1
        %s220 = scalar_select %p219, %s13, 1
        %s221 = scalar_lea.vmem %s3, %s220
      $region36: #{gradcam_forward.1} parent=27 // pred_fallthru
        _
    $region28: #{gradcam_forward.1} parent=5 // pred_fallthru
      _
    %p222 = scmp.le.s32.totalorder 1, %s13
    %p223 = scmp.lt.s32.totalorder %s13, 3
    %p224 = pnand %p222, %p223
    %p225 = pneg %p224
    // Predicated region
    $region37: #{gradcam_forward.1} parent=5 // pred_check
      _
    $region38: #{gradcam_forward.1} parent=5 // pred_check_branch
      %227 = sbr.rel (%p224) target = $region40
    $region39: #{gradcam_forward.1} parent=5 // pred_region
      %s228 = ssub.s32 %s13, 1
      %p229 = scmp.lt.s32.totalorder %s18, 1
      %s230 = scalar_select %p229, %s18, 1
      %s231 = smul.addr %s230, 2
      %s232 = smul.addr %s231, 8
      %s233 = scalar_lea.vmem %s0, %s232
      %p234 = pneg %p39
      %p235 = pneg %p36
      %p236 = pneg %p60
      %p237 = pneg %p57
      %p238 = pneg %p81
      %p239 = pneg %p78
      %p240 = scmp.lt.s32.totalorder %s18, 1
      %s241 = scalar_select %p240, %s18, 1
      %s242 = scalar_lea.vmem %s3, %s241
      %p243 = pneg %p107
      %p244 = pneg %p104
      %p245 = pneg %p128
      %p246 = pneg %p125
      %p247 = pneg %p154
      %p248 = pneg %p151
      %p249 = scmp.lt.s32.totalorder %s18, 1
      %s250 = scalar_select %p249, %s18, 1
      %s251 = smul.addr %s250, 2
      %s252 = scalar_lea.vmem %s5, %s251
      %p253 = pneg %p180
      %p254 = pneg %p177
      %p255 = scmp.lt.s32.totalorder %s18, 1
      %s256 = scalar_select %p255, %s18, 1
      %s257 = scalar_lea.vmem %s6, %s256
      %p258 = scmp.lt.s32.totalorder %s18, 1
      %s259 = scalar_select %p258, %s18, 1
      %s260 = smul.addr %s259, 2
      %s261 = smul.addr %s260, 8
      %s262 = scalar_lea.vmem %s0, %s261
      %p263 = scmp.lt.s32.totalorder %s18, 1
      %s264 = scalar_select %p263, %s18, 1
      %s265 = scalar_lea.vmem %s3, %s264
      %p266 = scmp.lt.s32.totalorder %s18, 1
      %s267 = scalar_select %p266, %s18, 1
      %s268 = smul.addr %s267, 2
      %s269 = scalar_lea.vmem %s5, %s268
      %p270 = scmp.lt.s32.totalorder %s18, 1
      %s271 = scalar_select %p270, %s18, 1
      %s272 = scalar_lea.vmem %s6, %s271
      %v273 = vld [vmem:[%s262] sm:$0x1]
      %vm274 = vcmask 581632
      %275 = vst.msk [vmem:[#allocation2] sm:$0x1] %vm274, %v273
      %v276 = vld [vmem:[%s262 + $0x1] sm:$0x1]
      %277 = vst.msk [vmem:[#allocation2 + $0x1] sm:$0x1] %vm274, %v276
      %v278 = vld [vmem:[%s262 + $0x2] sm:$0x1]
      %279 = vst.msk [vmem:[#allocation2 + $0x2] sm:$0x1] %vm274, %v278
      %v280 = vld [vmem:[%s262 + $0x3] sm:$0x1]
      %281 = vst.msk [vmem:[#allocation2 + $0x3] sm:$0x1] %vm274, %v280
      %v282 = vld [vmem:[%s262 + $0x4] sm:$0x1]
      %283 = vst.msk [vmem:[#allocation2 + $0x4] sm:$0x1] %vm274, %v282
      %v284 = vld [vmem:[%s262 + $0x5] sm:$0x1]
      %285 = vst.msk [vmem:[#allocation2 + $0x5] sm:$0x1] %vm274, %v284
      %v286 = vld [vmem:[%s262 + $0x6] sm:$0x1]
      %287 = vst.msk [vmem:[#allocation2 + $0x6] sm:$0x1] %vm274, %v286
      %v288 = vld [vmem:[%s262 + $0x7] sm:$0x1]
      %289 = vst.msk [vmem:[#allocation2 + $0x7] sm:$0x1] %vm274, %v288
      %v290 = vld [vmem:[%s262] sm:$0x1]
      %292 = vrot.lane.b32.xlu0 %v290, 127
      %v293 = vpop.permute.xlu0 %292
      %295 = vst.msk [vmem:[#allocation2 + $0x8] sm:$0x1] %vm274, %v293
      %v296 = vld [vmem:[%s262 + $0x1] sm:$0x1]
      %298 = vrot.lane.b32.xlu0 %v296, 127
      %v299 = vpop.permute.xlu0 %298
      %301 = vst.msk [vmem:[#allocation2 + $0x9] sm:$0x1] %vm274, %v299
      %v302 = vld [vmem:[%s262 + $0x2] sm:$0x1]
      %304 = vrot.lane.b32.xlu0 %v302, 127
      %v305 = vpop.permute.xlu0 %304
      %307 = vst.msk [vmem:[#allocation2 + $0xa] sm:$0x1] %vm274, %v305
      %v308 = vld [vmem:[%s262 + $0x3] sm:$0x1]
      %310 = vrot.lane.b32.xlu0 %v308, 127
      %v311 = vpop.permute.xlu0 %310
      %313 = vst.msk [vmem:[#allocation2 + $0xb] sm:$0x1] %vm274, %v311
      %v314 = vld [vmem:[%s262 + $0x8] sm:$0x1]
      %315 = vst.msk [vmem:[#allocation2 + $0xc] sm:$0x1] %vm274, %v314
      %v316 = vld [vmem:[%s262 + $0x9] sm:$0x1]
      %317 = vst.msk [vmem:[#allocation2 + $0xd] sm:$0x1] %vm274, %v316
      %v318 = vld [vmem:[%s262 + $0xa] sm:$0x1]
      %319 = vst.msk [vmem:[#allocation2 + $0xe] sm:$0x1] %vm274, %v318
      %v320 = vld [vmem:[%s262 + $0xb] sm:$0x1]
      %321 = vst.msk [vmem:[#allocation2 + $0xf] sm:$0x1] %vm274, %v320
      %v322 = vld [vmem:[%s262 + $0xc] sm:$0x1]
      %323 = vst.msk [vmem:[#allocation2 + $0x10] sm:$0x1] %vm274, %v322
      %v324 = vld [vmem:[%s262 + $0xd] sm:$0x1]
      %325 = vst.msk [vmem:[#allocation2 + $0x11] sm:$0x1] %vm274, %v324
      %v326 = vld [vmem:[%s262 + $0xe] sm:$0x1]
      %327 = vst.msk [vmem:[#allocation2 + $0x12] sm:$0x1] %vm274, %v326
      %v328 = vld [vmem:[%s262 + $0xf] sm:$0x1]
      %329 = vst.msk [vmem:[#allocation2 + $0x13] sm:$0x1] %vm274, %v328
      %v330 = vld [vmem:[%s262 + $0x8] sm:$0x1]
      %332 = vrot.lane.b32.xlu0 %v330, 127
      %v333 = vpop.permute.xlu0 %332
      %335 = vst.msk [vmem:[#allocation2 + $0x14] sm:$0x1] %vm274, %v333
      %v336 = vld [vmem:[%s262 + $0x9] sm:$0x1]
      %338 = vrot.lane.b32.xlu0 %v336, 127
      %v339 = vpop.permute.xlu0 %338
      %341 = vst.msk [vmem:[#allocation2 + $0x15] sm:$0x1] %vm274, %v339
      %v342 = vld [vmem:[%s262 + $0xa] sm:$0x1]
      %344 = vrot.lane.b32.xlu0 %v342, 127
      %v345 = vpop.permute.xlu0 %344
      %347 = vst.msk [vmem:[#allocation2 + $0x16] sm:$0x1] %vm274, %v345
      %v348 = vld [vmem:[%s262 + $0xb] sm:$0x1]
      %350 = vrot.lane.b32.xlu0 %v348, 127
      %v351 = vpop.permute.xlu0 %350
      %353 = vst.msk [vmem:[#allocation2 + $0x17] sm:$0x1] %vm274, %v351
      %v354 = vld [vmem:[%s262] sm:$0x1]
      %356 = vrot.lane.b32.xlu0 %v354, 119
      %v357 = vpop.permute.xlu0 %356
      %359 = vst.msk [vmem:[#allocation2 + $0x18] sm:$0x1] %vm274, %v357
      %v360 = vld [vmem:[%s262 + $0x1] sm:$0x1]
      %362 = vrot.lane.b32.xlu0 %v360, 119
      %v363 = vpop.permute.xlu0 %362
      %365 = vst.msk [vmem:[#allocation2 + $0x19] sm:$0x1] %vm274, %v363
      %v366 = vld [vmem:[%s262 + $0x2] sm:$0x1]
      %368 = vrot.lane.b32.xlu0 %v366, 119
      %v369 = vpop.permute.xlu0 %368
      %371 = vst.msk [vmem:[#allocation2 + $0x1a] sm:$0x1] %vm274, %v369
      %v372 = vld [vmem:[%s262 + $0x3] sm:$0x1]
      %374 = vrot.lane.b32.xlu0 %v372, 119
      %v375 = vpop.permute.xlu0 %374
      %377 = vst.msk [vmem:[#allocation2 + $0x1b] sm:$0x1] %vm274, %v375
      %v378 = vld [vmem:[%s262 + $0x4] sm:$0x1]
      %380 = vrot.lane.b32.xlu0 %v378, 119
      %v381 = vpop.permute.xlu0 %380
      %383 = vst.msk [vmem:[#allocation2 + $0x1c] sm:$0x1] %vm274, %v381
      %v384 = vld [vmem:[%s262 + $0x5] sm:$0x1]
      %386 = vrot.lane.b32.xlu0 %v384, 119
      %v387 = vpop.permute.xlu0 %386
      %389 = vst.msk [vmem:[#allocation2 + $0x1d] sm:$0x1] %vm274, %v387
      %v390 = vld [vmem:[%s262 + $0x6] sm:$0x1]
      %392 = vrot.lane.b32.xlu0 %v390, 119
      %v393 = vpop.permute.xlu0 %392
      %395 = vst.msk [vmem:[#allocation2 + $0x1e] sm:$0x1] %vm274, %v393
      %v396 = vld [vmem:[%s262 + $0x7] sm:$0x1]
      %398 = vrot.lane.b32.xlu0 %v396, 119
      %v399 = vpop.permute.xlu0 %398
      %401 = vst.msk [vmem:[#allocation2 + $0x1f] sm:$0x1] %vm274, %v399
      %v402 = vld [vmem:[%s262] sm:$0x1]
      %404 = vrot.lane.b32.xlu0 %v402, 118
      %v405 = vpop.permute.xlu0 %404
      %407 = vst.msk [vmem:[#allocation2 + $0x20] sm:$0x1] %vm274, %v405
      %v408 = vld [vmem:[%s262 + $0x1] sm:$0x1]
      %410 = vrot.lane.b32.xlu0 %v408, 118
      %v411 = vpop.permute.xlu0 %410
      %413 = vst.msk [vmem:[#allocation2 + $0x21] sm:$0x1] %vm274, %v411
      %v414 = vld [vmem:[%s262 + $0x2] sm:$0x1]
      %416 = vrot.lane.b32.xlu0 %v414, 118
      %v417 = vpop.permute.xlu0 %416
      %419 = vst.msk [vmem:[#allocation2 + $0x22] sm:$0x1] %vm274, %v417
      %v420 = vld [vmem:[%s262 + $0x3] sm:$0x1]
      %422 = vrot.lane.b32.xlu0 %v420, 118
      %v423 = vpop.permute.xlu0 %422
      %425 = vst.msk [vmem:[#allocation2 + $0x23] sm:$0x1] %vm274, %v423
      %v426 = vld [vmem:[%s1] sm:$0xff]
      %v427 = vld [vmem:[#allocation2] sm:$0xff]
      %v428 = vld [vmem:[#allocation2 + $0x8] sm:$0xff]
      %v429 = vld [vmem:[#allocation2 + $0x10] sm:$0xff]
      %v430 = vld [vmem:[#allocation2 + $0x18] sm:$0xff]
      %v431 = vld [vmem:[#allocation2 + $0x20] sm:$0xf]
      %v432 = vld [vmem:[%s2] sm:$0xff]
      %434 = vset.pattern.permute.xlu0 0
      %435 = vperm.xlu0 %434, %v432
      %v436 = vpop.permute.xlu0 %435
      %vm438 = vcmask 293888
      %v440 = vsel %vm438, %v426, 0
      %vm442 = vcmask 1043456
      %v444 = vsel %vm442, %v431, 0
      %446 = vmatprep.subr.mxu0 0.0
      %447 = vmatpush1.msra.mxu0 0.0
      %448 = vmatprep.subr.mxu0 0.0
      %449 = vmatpush1.msra.mxu0 0.0
      %450 = vmatprep.subr.mxu0 0.0
      %451 = vmatpush1.msra.mxu0 0.0
      %452 = vmatprep.subr.mxu0 0.0
      %453 = vmatpush1.msra.mxu0 0.0
      %454 = vmatprep.subr.mxu0 0.0
      %455 = vmatpush1.msra.mxu0 0.0
      %456 = vmatprep.subr.mxu0 0.0
      %457 = vmatpush1.msra.mxu0 0.0
      %458 = vmatprep.subr.mxu0 0.0
      %459 = vmatpush1.msra.mxu0 0.0
      %460 = vmatprep.subr.mxu0 0.0
      %461 = vmatpush1.msra.mxu0 0.0
      %462 = vmatprep.subr.mxu0 0.0
      %463 = vmatpush1.msra.mxu0 0.0
      %464 = vmatprep.subr.mxu0 0.0
      %465 = vmatpush1.msra.mxu0 0.0
      %466 = vmatprep.subr.mxu0 0.0
      %467 = vmatpush1.msra.mxu0 0.0
      %468 = vmatprep.subr.mxu0 0.0
      %469 = vmatpush1.msra.mxu0 %v444
      %470 = vmatprep.subr.mxu0 0.0
      %471 = vmatpush1.msra.mxu0 %v430
      %472 = vmatprep.subr.mxu0 0.0
      %473 = vmatpush1.msra.mxu0 %v429
      %474 = vmatprep.subr.mxu0 0.0
      %475 = vmatpush1.msra.mxu0 %v428
      %476 = vmatprep.subr.mxu0 0.0
      %477 = vmatpush1.msra.mxu0 %v427
      %478 = vmatprep.subr.mxu0 0.0
      %479 = vmatpush2.msra.mxu0 0.0
      %480 = vmatprep.subr.mxu0 0.0
      %481 = vmatpush2.msra.mxu0 0.0
      %482 = vmatprep.subr.mxu0 0.0
      %483 = vmatpush2.msra.mxu0 0.0
      %484 = vmatprep.subr.mxu0 0.0
      %485 = vmatpush2.msra.mxu0 0.0
      %486 = vmatprep.subr.mxu0 0.0
      %487 = vmatpush2.msra.mxu0 0.0
      %488 = vmatprep.subr.mxu0 0.0
      %489 = vmatpush2.msra.mxu0 0.0
      %490 = vmatprep.subr.mxu0 0.0
      %491 = vmatpush2.msra.mxu0 0.0
      %492 = vmatprep.subr.mxu0 0.0
      %493 = vmatpush2.msra.mxu0 0.0
      %494 = vmatprep.subr.mxu0 0.0
      %495 = vmatpush2.msra.mxu0 0.0
      %496 = vmatprep.subr.mxu0 0.0
      %497 = vmatpush2.msra.mxu0 0.0
      %498 = vmatprep.subr.mxu0 0.0
      %499 = vmatpush2.msra.mxu0 0.0
      %500 = vmatprep.subr.mxu0 0.0
      %501 = vmatpush2.msra.mxu0 0.0
      %502 = vmatprep.subr.mxu0 0.0
      %503 = vmatpush2.msra.mxu0 0.0
      %504 = vmatprep.subr.mxu0 0.0
      %505 = vmatpush2.msra.mxu0 0.0
      %506 = vmatprep.subr.mxu0 0.0
      %507 = vmatpush2.msra.mxu0 0.0
      %508 = vmatprep.subr.mxu0 0.0
      %509 = vmatpush2.msra.mxu0 0.0
      %510 = vmatprep.mubr.f32.mxu0 0.0
      %511 = vmatmul.mubr.f32.gmra.mxu0 %v440
      %v512 = vpop.f32.mrf.mxu0
      %v513 = vadd.f32 %v436, %v512
      %v514 = vpop.f32.mrf.mxu0
      %515 = vdwg.mxu0
      %v516 = vmax.f32 %v513, 0.0
      %v517 = vld [vmem:[%s265] sm:$0x1]
      %vm518 = vcmask 64512
      %v520 = vsel %vm518, %v517, 0
      %522 = vmatprep.subr.mxu0 0.0
      %523 = vmatpush1.msra.mxu0 0.0
      %524 = vmatprep.subr.mxu0 0.0
      %525 = vmatpush1.msra.mxu0 0.0
      %526 = vmatprep.subr.mxu0 0.0
      %527 = vmatpush1.msra.mxu0 0.0
      %528 = vmatprep.subr.mxu0 0.0
      %529 = vmatpush1.msra.mxu0 0.0
      %530 = vmatprep.subr.mxu0 0.0
      %531 = vmatpush1.msra.mxu0 0.0
      %532 = vmatprep.subr.mxu0 0.0
      %533 = vmatpush1.msra.mxu0 0.0
      %534 = vmatprep.subr.mxu0 0.0
      %535 = vmatpush1.msra.mxu0 0.0
      %536 = vmatprep.subr.mxu0 0.0
      %537 = vmatpush1.msra.mxu0 0.0
      %538 = vmatprep.subr.mxu0 0.0
      %539 = vmatpush1.msra.mxu0 0.0
      %540 = vmatprep.subr.mxu0 0.0
      %541 = vmatpush1.msra.mxu0 0.0
      %542 = vmatprep.subr.mxu0 0.0
      %543 = vmatpush1.msra.mxu0 0.0
      %544 = vmatprep.subr.mxu0 0.0
      %545 = vmatpush1.msra.mxu0 0.0
      %546 = vmatprep.subr.mxu0 0.0
      %547 = vmatpush1.msra.mxu0 0.0
      %548 = vmatprep.subr.mxu0 0.0
      %549 = vmatpush1.msra.mxu0 0.0
      %550 = vmatprep.subr.mxu0 0.0
      %551 = vmatpush1.msra.mxu0 0.0
      %552 = vmatprep.subr.mxu0 0.0
      %553 = vmatpush1.msra.mxu0 %v516
      %554 = vmatprep.subr.mxu0 0.0
      %555 = vmatpush2.msra.mxu0 0.0
      %556 = vmatprep.subr.mxu0 0.0
      %557 = vmatpush2.msra.mxu0 0.0
      %558 = vmatprep.subr.mxu0 0.0
      %559 = vmatpush2.msra.mxu0 0.0
      %560 = vmatprep.subr.mxu0 0.0
      %561 = vmatpush2.msra.mxu0 0.0
      %562 = vmatprep.subr.mxu0 0.0
      %563 = vmatpush2.msra.mxu0 0.0
      %564 = vmatprep.subr.mxu0 0.0
      %565 = vmatpush2.msra.mxu0 0.0
      %566 = vmatprep.subr.mxu0 0.0
      %567 = vmatpush2.msra.mxu0 0.0
      %568 = vmatprep.subr.mxu0 0.0
      %569 = vmatpush2.msra.mxu0 0.0
      %570 = vmatprep.subr.mxu0 0.0
      %571 = vmatpush2.msra.mxu0 0.0
      %572 = vmatprep.subr.mxu0 0.0
      %573 = vmatpush2.msra.mxu0 0.0
      %574 = vmatprep.subr.mxu0 0.0
      %575 = vmatpush2.msra.mxu0 0.0
      %576 = vmatprep.subr.mxu0 0.0
      %577 = vmatpush2.msra.mxu0 0.0
      %578 = vmatprep.subr.mxu0 0.0
      %579 = vmatpush2.msra.mxu0 0.0
      %580 = vmatprep.subr.mxu0 0.0
      %581 = vmatpush2.msra.mxu0 0.0
      %582 = vmatprep.subr.mxu0 0.0
      %583 = vmatpush2.msra.mxu0 0.0
      %584 = vmatprep.subr.mxu0 0.0
      %585 = vmatpush2.msra.mxu0 0.0
      %586 = vmatprep.mubr.f32.mxu0 0.0
      %587 = vmatmul.mubr.f32.gmra.mxu0 %v520
      %v588 = vpop.f32.mrf.mxu0
      %v589 = vadd.f32 0.0, %v588
      %v590 = vpop.f32.mrf.mxu0
      %591 = vdwg.mxu0
      %v592 = vmax.f32 %v589, 0.0
      %v593 = vld [vmem:[%s4] sm:$0xff]
      %v594 = vld [vmem:[%s4 + $0x8] sm:$0xff]
      %v595 = vld [vmem:[%s4 + $0x10] sm:$0xff]
      %v596 = vld [vmem:[%s4 + $0x18] sm:$0xff]
      %v597 = vld [vmem:[%s4 + $0x20] sm:$0xff]
      %v598 = vld [vmem:[%s4 + $0x28] sm:$0xff]
      %v599 = vld [vmem:[%s4 + $0x30] sm:$0xff]
      %v600 = vld [vmem:[%s4 + $0x38] sm:$0xff]
      %v601 = vld [vmem:[%s4 + $0x40] sm:$0xff]
      %v602 = vld [vmem:[%s4 + $0x48] sm:$0xff]
      %v603 = vld [vmem:[%s4 + $0x50] sm:$0xff]
      %v604 = vld [vmem:[%s4 + $0x58] sm:$0xff]
      %v605 = vld [vmem:[%s4 + $0x60] sm:$0xff]
      %v606 = vld [vmem:[%s4 + $0x68] sm:$0xff]
      %v607 = vld [vmem:[%s4 + $0x70] sm:$0xff]
      %v608 = vld [vmem:[%s4 + $0x78] sm:$0xff]
      %v609 = vld [vmem:[%s4 + $0x80] sm:$0xff]
      %v610 = vld [vmem:[%s4 + $0x88] sm:$0xff]
      %vm611 = vcmask 588800
      %v613 = vsel %vm611, %v592, 0
      %615 = vmatprep.subr.mxu0 0.0
      %616 = vmatpush1.msra.mxu0 0.0
      %617 = vmatprep.subr.mxu0 0.0
      %618 = vmatpush1.msra.mxu0 0.0
      %619 = vmatprep.subr.mxu0 0.0
      %620 = vmatpush1.msra.mxu0 0.0
      %621 = vmatprep.subr.mxu0 0.0
      %622 = vmatpush1.msra.mxu0 0.0
      %623 = vmatprep.subr.mxu0 0.0
      %624 = vmatpush1.msra.mxu0 0.0
      %625 = vmatprep.subr.mxu0 0.0
      %626 = vmatpush1.msra.mxu0 0.0
      %627 = vmatprep.subr.mxu0 0.0
      %628 = vmatpush1.msra.mxu0 0.0
      %629 = vmatprep.subr.mxu0 %v610
      %630 = vmatpush1.msra.mxu0 %v609
      %631 = vmatprep.subr.mxu0 %v608
      %632 = vmatpush1.msra.mxu0 %v607
      %633 = vmatprep.subr.mxu0 %v606
      %634 = vmatpush1.msra.mxu0 %v605
      %635 = vmatprep.subr.mxu0 %v604
      %636 = vmatpush1.msra.mxu0 %v603
      %637 = vmatprep.subr.mxu0 %v602
      %638 = vmatpush1.msra.mxu0 %v601
      %639 = vmatprep.subr.mxu0 %v600
      %640 = vmatpush1.msra.mxu0 %v599
      %641 = vmatprep.subr.mxu0 %v598
      %642 = vmatpush1.msra.mxu0 %v597
      %643 = vmatprep.subr.mxu0 %v596
      %644 = vmatpush1.msra.mxu0 %v595
      %645 = vmatprep.subr.mxu0 %v594
      %646 = vmatpush1.msra.mxu0 %v593
      %647 = vmatprep.subr.mxu0 0.0
      %648 = vmatpush2.msra.mxu0 0.0
      %649 = vmatprep.subr.mxu0 0.0
      %650 = vmatpush2.msra.mxu0 0.0
      %651 = vmatprep.subr.mxu0 0.0
      %652 = vmatpush2.msra.mxu0 0.0
      %653 = vmatprep.subr.mxu0 0.0
      %654 = vmatpush2.msra.mxu0 0.0
      %655 = vmatprep.subr.mxu0 0.0
      %656 = vmatpush2.msra.mxu0 0.0
      %657 = vmatprep.subr.mxu0 0.0
      %658 = vmatpush2.msra.mxu0 0.0
      %659 = vmatprep.subr.mxu0 0.0
      %660 = vmatpush2.msra.mxu0 0.0
      %661 = vmatprep.subr.mxu0 0.0
      %662 = vmatpush2.msra.mxu0 0.0
      %663 = vmatprep.subr.mxu0 0.0
      %664 = vmatpush2.msra.mxu0 0.0
      %665 = vmatprep.subr.mxu0 0.0
      %666 = vmatpush2.msra.mxu0 0.0
      %667 = vmatprep.subr.mxu0 0.0
      %668 = vmatpush2.msra.mxu0 0.0
      %669 = vmatprep.subr.mxu0 0.0
      %670 = vmatpush2.msra.mxu0 0.0
      %671 = vmatprep.subr.mxu0 0.0
      %672 = vmatpush2.msra.mxu0 0.0
      %673 = vmatprep.subr.mxu0 0.0
      %674 = vmatpush2.msra.mxu0 0.0
      %675 = vmatprep.subr.mxu0 0.0
      %676 = vmatpush2.msra.mxu0 0.0
      %677 = vmatprep.subr.mxu0 0.0
      %678 = vmatpush2.msra.mxu0 0.0
      %679 = vmatprep.mubr.f32.mxu0 0.0
      %680 = vmatmul.mubr.f32.gmra.mxu0 %v613
      %v681 = vpop.f32.mrf.mxu0
      %v682 = vadd.f32 0.0, %v681
      %v683 = vpop.f32.mrf.mxu0
      %v684 = vadd.f32 0.0, %v683
      %685 = vdwg.mxu0
      %v688 = vcombine.low %v682, %v684
      %v690 = vunpack.c.l.s4 1966171168
      %v691 = vunpack.c.0.s8 %v690
      %v692 = vlaneseq
      %v693 = vshrl.u32 %v692, 7
      %v694 = vsub.s32 %v691, %v693
      %v695 = vrot.slane %v688, %v694
      %v697 = vunpack.c.l.s4 1966171168
      %v698 = vunpack.c.0.s8 %v697
      %v699 = vlaneseq
      %v700 = vshrl.u32 %v699, 7
      %v701 = vsub.s32 %v698, %v700
      %v702 = vrot.slane %v695, %v701
      %v704 = vlaneseq
      %vm705 = vcmp.ge.s32.totalorder %v704, 0
      %vm706 = vcmp.lt.s32.totalorder %v704, 256
      %vm707 = vmand %vm705, %vm706
      %708 = vst.msk [vmem:[%s269] sm:$0x3] %vm707, %v702
      %vm709 = vcmask 1040384
      %v710 = vsel %vm709, %v682, inf
      %v711 = vsel %vm709, %v684, inf
      %v712 = vmin.f32 %v710, %v711
      %713 = vmin.xlane.f32.xlu0 %v712
      %v714 = vpop.xlane.xlu0 %713
      %v715 = vsel %vm709, %v682, -inf
      %v716 = vsel %vm709, %v684, -inf
      %v717 = vmax.f32 %v715, %v716
      %718 = vmax.xlane.f32.xlu0 %v717
      %v719 = vpop.xlane.xlu0 %718
      %vm720 = vcmask 7168
      %v721 = vsel %vm720, %v714, %v719
      %vm722 = vcmask 8192
      %723 = vst.msk [vmem:[%s272] sm:$0x1] %vm722, %v721
      %p724 = scmp.lt.s32.totalorder %s18, 1
      %s725 = scalar_select %p724, %s18, 1
      %s726 = smul.addr %s725, 2
      %s727 = scalar_lea.vmem %s5, %s726
      %p728 = scmp.lt.s32.totalorder %s18, 1
      %s729 = scalar_select %p728, %s18, 1
      %s730 = scalar_lea.vmem %s6, %s729
      // Predicated region
      $region41: #{gradcam_forward.1} parent=39 // pred_check
        %p731 = pneg %p151
      $region42: #{gradcam_forward.1} parent=39 // pred_check_branch
        %733 = sbr.rel (%p731) target = $region44
      $region43: #{gradcam_forward.1} parent=39 // pred_region
        _
      $region44: #{gradcam_forward.1} parent=39 // pred_fallthru
        _
      // Predicated region
      $region45: #{gradcam_forward.1} parent=39 // pred_check
        %p734 = pneg %p177
      $region46: #{gradcam_forward.1} parent=39 // pred_check_branch
        %736 = sbr.rel (%p734) target = $region48
      $region47: #{gradcam_forward.1} parent=39 // pred_region
        _
      $region48: #{gradcam_forward.1} parent=39 // pred_fallthru
        _
    $region40: #{gradcam_forward.1} parent=5 // pred_fallthru
      _
    %p737 = scmp.le.s32.totalorder 2, %s13
    // Predicated region
    $region49: #{gradcam_forward.1} parent=5 // pred_check
      %p738 = pneg %p737
    $region50: #{gradcam_forward.1} parent=5 // pred_check_branch
      %740 = sbr.rel (%p738) target = $region52
    $region51: #{gradcam_forward.1} parent=5 // pred_region
      %s741 = ssub.s32 %s13, 2
      // Predicated region
      $region53: #{gradcam_forward.1} parent=51 // pred_check
        %p742 = pneg %p157
      $region54: #{gradcam_forward.1} parent=51 // pred_check_branch
        %744 = sbr.rel (%p742) target = $region56
      $region55: #{gradcam_forward.1} parent=51 // pred_region
        %p745 = scmp.lt.s32.totalorder %s19, 1
        %s746 = scalar_select %p745, %s19, 1
        %s747 = smul.addr %s746, 2
        %s748 = scalar_lea.vmem %s5, %s747
      $region56: #{gradcam_forward.1} parent=51 // pred_fallthru
        _
      // Predicated region
      $region57: #{gradcam_forward.1} parent=51 // pred_check
        %p749 = pneg %p183
      $region58: #{gradcam_forward.1} parent=51 // pred_check_branch
        %751 = sbr.rel (%p749) target = $region60
      $region59: #{gradcam_forward.1} parent=51 // pred_region
        %p752 = scmp.lt.s32.totalorder %s19, 1
        %s753 = scalar_select %p752, %s19, 1
        %s754 = scalar_lea.vmem %s6, %s753
      $region60: #{gradcam_forward.1} parent=51 // pred_fallthru
        _
    $region52: #{gradcam_forward.1} parent=5 // pred_fallthru
      _
  $region6: #{gradcam_forward.1} parent=0 // loop_footer
    %s17 = sadd.s32 1, %s13
  $region7: #{gradcam_forward.1} parent=0 // loop_footer_branch
    %12 = sbr.rel target = $region3
  $region8: #{gradcam_forward.1} parent=0 // loop_exit
    _

</llo_original>
